<compile_context>
chip_gen: v6e
topology: v6e:2x2x1
jax: 0.10.0
libtpu: 0.0.40
codegen_flags: <defaults>
</compile_context>

<pallas_src>
import functools

import jax
import jax.numpy as jnp
from jax.experimental import pallas as pl
from jax.experimental.pallas import tpu as pltpu

LANE = 128


def _round_up(n, m):
    return ((n + m - 1) // m) * m


def _mlp_kernel(x_ref, m1_ref, m2_ref, m3_ref,
                w1_ref, b1_ref, w2_ref, b2_ref,
                w3_ref, b3_ref, w4_ref, b4_ref,
                o_ref, *, n_output):
    def dense(h, w_ref, b_ref):
        # bf16 x bf16 -> f32 accumulate on the MXU.
        return jnp.dot(h.astype(jnp.bfloat16), w_ref[...],
                       preferred_element_type=jnp.float32) + b_ref[...]

    def relu_dropout(z, m_ref):
        z = jnp.maximum(z, 0.0)                      # ReLU (f32 on the VPU)
        # Precomputed dropout mask: 0.0 (dropped) or 2.0 (kept * 1/(1-p)).
        return z * m_ref[...]

    h = relu_dropout(dense(x_ref[...], w1_ref, b1_ref), m1_ref)
    h = relu_dropout(dense(h, w2_ref, b2_ref), m2_ref)
    h = relu_dropout(dense(h, w3_ref, b3_ref), m3_ref)

    # Output layer + log_softmax over dim=1 (feature axis), excluding padded lanes.
    z = dense(h, w4_ref, b4_ref)
    lane = jax.lax.broadcasted_iota(jnp.int32, z.shape, 1)
    z = jnp.where(lane < n_output, z, -1e30)
    m = jnp.max(z, axis=-1, keepdims=True)
    lse = m + jnp.log(jnp.sum(jnp.exp(z - m), axis=-1, keepdims=True))
    o_ref[...] = (z - lse).astype(o_ref.dtype)


def network_forward(x, params, key, training=True):
    """x: [B, n_input] float32. params: list of (w [in, out], b [out]) for 4 layers."""
    (w1, b1), (w2, b2), (w3, b3), (w4, b4) = params
    B, n_input = x.shape
    n_h1, n_h2, n_h3 = w1.shape[1], w2.shape[1], w3.shape[1]
    n_output = w4.shape[1]

    # Lane-dense padded widths (multiples of 128).
    p_in = _round_up(n_input, LANE)
    p_h1 = _round_up(n_h1, LANE)
    p_h2 = _round_up(n_h2, LANE)
    p_h3 = _round_up(n_h3, LANE)
    p_out = _round_up(n_output, LANE)

    # Batch tiling: large tiles to amortize per-step overhead and fill the MXU
    # rows; tiny problems collapse to a single (sublane-aligned) tile.
    tb = min(512, _round_up(B, 8))
    pb = _round_up(B, tb)
    grid = (pb // tb,)

    f32 = jnp.float32

    def pad2(a, r, c):
        return jnp.pad(a, ((0, r - a.shape[0]), (0, c - a.shape[1])))

    def pad_w(w, r, c):
        return pad2(w.astype(f32), r, c).astype(jnp.bfloat16)

    def pad_b(b, c):
        return jnp.pad(b.astype(f32), (0, c - b.shape[0])).reshape(1, c)

    xp = pad2(x.astype(f32), pb, p_in)
    w1p, b1p = pad_w(w1, p_in, p_h1), pad_b(b1, p_h1)
    w2p, b2p = pad_w(w2, p_h1, p_h2), pad_b(b2, p_h2)
    w3p, b3p = pad_w(w3, p_h2, p_h3), pad_b(b3, p_h3)
    w4p, b4p = pad_w(w4, p_h3, p_out), pad_b(b4, p_out)

    # F.dropout defaults: p=0.5, training=True -> keep w.p. 0.5, scale kept by 2.
    if training:
        k1, k2, k3 = jax.random.split(key, 3)
        m1 = jax.random.bernoulli(k1, 0.5, (pb, p_h1)).astype(f32) * 2.0
        m2 = jax.random.bernoulli(k2, 0.5, (pb, p_h2)).astype(f32) * 2.0
        m3 = jax.random.bernoulli(k3, 0.5, (pb, p_h3)).astype(f32) * 2.0
    else:
        m1 = jnp.ones((pb, p_h1), f32)
        m2 = jnp.ones((pb, p_h2), f32)
        m3 = jnp.ones((pb, p_h3), f32)

    def batched(width):
        return pl.BlockSpec((tb, width), lambda i: (i, 0))

    def resident(rows, cols):
        return pl.BlockSpec((rows, cols), lambda i: (0, 0))

    out_padded = pl.pallas_call(
        functools.partial(_mlp_kernel, n_output=n_output),
        out_shape=jax.ShapeDtypeStruct((pb, p_out), jnp.float32),
        grid=grid,
        in_specs=[
            batched(p_in),                     # x tile
            batched(p_h1), batched(p_h2), batched(p_h3),   # dropout masks
            resident(p_in, p_h1), resident(1, p_h1),       # fc1
            resident(p_h1, p_h2), resident(1, p_h2),       # fc2
            resident(p_h2, p_h3), resident(1, p_h3),       # fc3
            resident(p_h3, p_out), resident(1, p_out),     # output
        ],
        out_specs=batched(p_out),
        compiler_params=pltpu.CompilerParams(
            dimension_semantics=("parallel",)),
    )(xp, m1, m2, m3, w1p, b1p, w2p, b2p, w3p, b3p, w4p, b4p)

    return out_padded[:B, :n_output]


def init_linear(key, fan_in, fan_out):
    """Deterministic init matching nn.Linear's U(-1/sqrt(fan_in), +1/sqrt(fan_in))."""
    kw, kb = jax.random.split(key)
    bound = 1.0 / float(jnp.sqrt(jnp.float32(fan_in)))
    w = jax.random.uniform(kw, (fan_in, fan_out), jnp.float32, -bound, bound)
    b = jax.random.uniform(kb, (fan_out,), jnp.float32, -bound, bound)
    return w, b


if __name__ == "__main__":
    # Small shapes consistent with Network(n_input, n_h1, n_h2, n_h3, n_output).
    B = 8
    n_input, n_h1, n_h2, n_h3, n_output = 32, 64, 64, 32, 10

    key = jax.random.PRNGKey(0)
    k1, k2, k3, k4, kx, kdrop = jax.random.split(key, 6)
    params = [
        init_linear(k1, n_input, n_h1),
        init_linear(k2, n_h1, n_h2),
        init_linear(k3, n_h2, n_h3),
        init_linear(k4, n_h3, n_output),
    ]
    x = jax.random.normal(kx, (B, n_input), jnp.float32)

    out = network_forward(x, params, kdrop, training=True)
    out = jax.block_until_ready(out)

    assert out.shape == (B, n_output), out.shape
    # log_softmax rows must log-sum-exp to ~0.
    row_lse = jax.nn.logsumexp(out, axis=1)
    assert bool(jnp.all(jnp.abs(row_lse) < 1e-3)), row_lse
    print("KERNEL_OK")
</pallas_src>

<mosaic_0001>
module attributes {stable_mosaic.version = 11 : i64} {
  func.func @_mlp_kernel(%arg0: i32, %arg1: memref<8x128xf32, #tpu.memory_space<vmem>>, %arg2: memref<8x128xf32, #tpu.memory_space<vmem>>, %arg3: memref<8x128xf32, #tpu.memory_space<vmem>>, %arg4: memref<8x128xf32, #tpu.memory_space<vmem>>, %arg5: memref<128x128xbf16, #tpu.memory_space<vmem>>, %arg6: memref<1x128xf32, #tpu.memory_space<vmem>>, %arg7: memref<128x128xbf16, #tpu.memory_space<vmem>>, %arg8: memref<1x128xf32, #tpu.memory_space<vmem>>, %arg9: memref<128x128xbf16, #tpu.memory_space<vmem>>, %arg10: memref<1x128xf32, #tpu.memory_space<vmem>>, %arg11: memref<128x128xbf16, #tpu.memory_space<vmem>>, %arg12: memref<1x128xf32, #tpu.memory_space<vmem>>, %arg13: memref<8x128xf32, #tpu.memory_space<vmem>>) attributes {dimension_semantics = [#tpu.dimension_semantics<parallel>], iteration_bounds = array<i64: 1>, scalar_prefetch = 0 : i64, scratch_operands = 0 : i64, tpu.core_type = #tpu.core_type<tc>, window_params = [{transform_indices = @transform_0, window_bounds = array<i64: 8, 128>}, {transform_indices = @transform_1, window_bounds = array<i64: 8, 128>}, {transform_indices = @transform_2, window_bounds = array<i64: 8, 128>}, {transform_indices = @transform_3, window_bounds = array<i64: 8, 128>}, {pipeline_mode = #tpu.pipeline_mode<synchronous>, transform_indices = @transform_4, window_bounds = array<i64: 128, 128>}, {pipeline_mode = #tpu.pipeline_mode<synchronous>, transform_indices = @transform_5, window_bounds = array<i64: 1, 128>}, {pipeline_mode = #tpu.pipeline_mode<synchronous>, transform_indices = @transform_6, window_bounds = array<i64: 128, 128>}, {pipeline_mode = #tpu.pipeline_mode<synchronous>, transform_indices = @transform_7, window_bounds = array<i64: 1, 128>}, {pipeline_mode = #tpu.pipeline_mode<synchronous>, transform_indices = @transform_8, window_bounds = array<i64: 128, 128>}, {pipeline_mode = #tpu.pipeline_mode<synchronous>, transform_indices = @transform_9, window_bounds = array<i64: 1, 128>}, {pipeline_mode = #tpu.pipeline_mode<synchronous>, transform_indices = @transform_10, window_bounds = array<i64: 128, 128>}, {pipeline_mode = #tpu.pipeline_mode<synchronous>, transform_indices = @transform_11, window_bounds = array<i64: 1, 128>}, {transform_indices = @transform_12, window_bounds = array<i64: 8, 128>}]} {
    %c0 = arith.constant 0 : index
    %c0_0 = arith.constant 0 : index
    %0 = vector.load %arg1[%c0, %c0_0] : memref<8x128xf32, #tpu.memory_space<vmem>>, vector<8x128xf32>
    %1 = arith.truncf %0 : vector<8x128xf32> to vector<8x128xbf16>
    %c0_1 = arith.constant 0 : index
    %c0_2 = arith.constant 0 : index
    %2 = vector.load %arg5[%c0_1, %c0_2] : memref<128x128xbf16, #tpu.memory_space<vmem>>, vector<128x128xbf16>
    %cst = arith.constant dense<0.000000e+00> : vector<8x128xf32>
    %3 = tpu.matmul %1, %2, %cst {dimension_numbers = #tpu.dot_dimension_numbers<[1], [0], [0], [1], [0, 0, 1, 1], [], []>} : vector<8x128xbf16>, vector<128x128xbf16>, vector<8x128xf32> -> vector<8x128xf32>
    %c0_3 = arith.constant 0 : index
    %c0_4 = arith.constant 0 : index
    %4 = vector.load %arg6[%c0_3, %c0_4] : memref<1x128xf32, #tpu.memory_space<vmem>>, vector<1x128xf32>
    %5 = vector.broadcast %4 : vector<1x128xf32> to vector<8x128xf32>
    %6 = arith.addf %3, %5 : vector<8x128xf32>
    %cst_5 = arith.constant 0.000000e+00 : f32
    %7 = vector.broadcast %cst_5 : f32 to vector<8x128xf32>
    %8 = arith.maximumf %6, %7 : vector<8x128xf32>
    %c0_6 = arith.constant 0 : index
    %c0_7 = arith.constant 0 : index
    %9 = vector.load %arg2[%c0_6, %c0_7] : memref<8x128xf32, #tpu.memory_space<vmem>>, vector<8x128xf32>
    %10 = arith.mulf %8, %9 : vector<8x128xf32>
    %11 = arith.truncf %10 : vector<8x128xf32> to vector<8x128xbf16>
    %c0_8 = arith.constant 0 : index
    %c0_9 = arith.constant 0 : index
    %12 = vector.load %arg7[%c0_8, %c0_9] : memref<128x128xbf16, #tpu.memory_space<vmem>>, vector<128x128xbf16>
    %cst_10 = arith.constant dense<0.000000e+00> : vector<8x128xf32>
    %13 = tpu.matmul %11, %12, %cst_10 {dimension_numbers = #tpu.dot_dimension_numbers<[1], [0], [0], [1], [0, 0, 1, 1], [], []>} : vector<8x128xbf16>, vector<128x128xbf16>, vector<8x128xf32> -> vector<8x128xf32>
    %c0_11 = arith.constant 0 : index
    %c0_12 = arith.constant 0 : index
    %14 = vector.load %arg8[%c0_11, %c0_12] : memref<1x128xf32, #tpu.memory_space<vmem>>, vector<1x128xf32>
    %15 = vector.broadcast %14 : vector<1x128xf32> to vector<8x128xf32>
    %16 = arith.addf %13, %15 : vector<8x128xf32>
    %cst_13 = arith.constant 0.000000e+00 : f32
    %17 = vector.broadcast %cst_13 : f32 to vector<8x128xf32>
    %18 = arith.maximumf %16, %17 : vector<8x128xf32>
    %c0_14 = arith.constant 0 : index
    %c0_15 = arith.constant 0 : index
    %19 = vector.load %arg3[%c0_14, %c0_15] : memref<8x128xf32, #tpu.memory_space<vmem>>, vector<8x128xf32>
    %20 = arith.mulf %18, %19 : vector<8x128xf32>
    %21 = arith.truncf %20 : vector<8x128xf32> to vector<8x128xbf16>
    %c0_16 = arith.constant 0 : index
    %c0_17 = arith.constant 0 : index
    %22 = vector.load %arg9[%c0_16, %c0_17] : memref<128x128xbf16, #tpu.memory_space<vmem>>, vector<128x128xbf16>
    %cst_18 = arith.constant dense<0.000000e+00> : vector<8x128xf32>
    %23 = tpu.matmul %21, %22, %cst_18 {dimension_numbers = #tpu.dot_dimension_numbers<[1], [0], [0], [1], [0, 0, 1, 1], [], []>} : vector<8x128xbf16>, vector<128x128xbf16>, vector<8x128xf32> -> vector<8x128xf32>
    %c0_19 = arith.constant 0 : index
    %c0_20 = arith.constant 0 : index
    %24 = vector.load %arg10[%c0_19, %c0_20] : memref<1x128xf32, #tpu.memory_space<vmem>>, vector<1x128xf32>
    %25 = vector.broadcast %24 : vector<1x128xf32> to vector<8x128xf32>
    %26 = arith.addf %23, %25 : vector<8x128xf32>
    %cst_21 = arith.constant 0.000000e+00 : f32
    %27 = vector.broadcast %cst_21 : f32 to vector<8x128xf32>
    %28 = arith.maximumf %26, %27 : vector<8x128xf32>
    %c0_22 = arith.constant 0 : index
    %c0_23 = arith.constant 0 : index
    %29 = vector.load %arg4[%c0_22, %c0_23] : memref<8x128xf32, #tpu.memory_space<vmem>>, vector<8x128xf32>
    %30 = arith.mulf %28, %29 : vector<8x128xf32>
    %31 = arith.truncf %30 : vector<8x128xf32> to vector<8x128xbf16>
    %c0_24 = arith.constant 0 : index
    %c0_25 = arith.constant 0 : index
    %32 = vector.load %arg11[%c0_24, %c0_25] : memref<128x128xbf16, #tpu.memory_space<vmem>>, vector<128x128xbf16>
    %cst_26 = arith.constant dense<0.000000e+00> : vector<8x128xf32>
    %33 = tpu.matmul %31, %32, %cst_26 {dimension_numbers = #tpu.dot_dimension_numbers<[1], [0], [0], [1], [0, 0, 1, 1], [], []>} : vector<8x128xbf16>, vector<128x128xbf16>, vector<8x128xf32> -> vector<8x128xf32>
    %c0_27 = arith.constant 0 : index
    %c0_28 = arith.constant 0 : index
    %34 = vector.load %arg12[%c0_27, %c0_28] : memref<1x128xf32, #tpu.memory_space<vmem>>, vector<1x128xf32>
    %35 = vector.broadcast %34 : vector<1x128xf32> to vector<8x128xf32>
    %36 = arith.addf %33, %35 : vector<8x128xf32>
    %37 = tpu.iota {dimensions = array<i32: 1>} : vector<8x128xi32>
    %c10_i32 = arith.constant 10 : i32
    %38 = vector.broadcast %c10_i32 : i32 to vector<8x128xi32>
    %39 = arith.cmpi slt, %37, %38 : vector<8x128xi32>
    %cst_29 = arith.constant -1.000000e+30 : f32
    %40 = vector.broadcast %cst_29 : f32 to vector<8x128xf32>
    %41 = arith.select %39, %36, %40 : vector<8x128xi1>, vector<8x128xf32>
    %cst_30 = arith.constant dense<0xFF800000> : vector<8xf32>
    %42 = vector.multi_reduction <maximumf>, %41, %cst_30 [1] : vector<8x128xf32> to vector<8xf32>
    %43 = vector.shape_cast %42 : vector<8xf32> to vector<8x1xf32>
    %44 = vector.broadcast %43 : vector<8x1xf32> to vector<8x128xf32>
    %45 = arith.subf %41, %44 : vector<8x128xf32>
    %46 = math.exp %45 : vector<8x128xf32>
    %cst_31 = arith.constant dense<0.000000e+00> : vector<8xf32>
    %47 = vector.multi_reduction <add>, %46, %cst_31 [1] : vector<8x128xf32> to vector<8xf32>
    %48 = vector.shape_cast %47 : vector<8xf32> to vector<8x1xf32>
    %49 = math.log %48 : vector<8x1xf32>
    %50 = arith.addf %43, %49 : vector<8x1xf32>
    %51 = vector.broadcast %50 : vector<8x1xf32> to vector<8x128xf32>
    %52 = arith.subf %41, %51 : vector<8x128xf32>
    %c0_32 = arith.constant 0 : index
    %c0_33 = arith.constant 0 : index
    %53 = vector.load %arg13[%c0_32, %c0_33] : memref<8x128xf32, #tpu.memory_space<vmem>>, vector<8x128xf32>
    tpu.vector_store %arg13[%c0_32, %c0_33], %52 {strides = array<i32>} : memref<8x128xf32, #tpu.memory_space<vmem>>, vector<8x128xf32>,
    return
  }
  func.func @transform_0(%arg0: i32) -> (i32, i32) {
    %c0_i32 = arith.constant 0 : i32
    %c0_i32_0 = arith.constant 0 : i32
    return %arg0, %c0_i32 : i32, i32
  }
  func.func @transform_1(%arg0: i32) -> (i32, i32) {
    %c0_i32 = arith.constant 0 : i32
    %c0_i32_0 = arith.constant 0 : i32
    return %arg0, %c0_i32 : i32, i32
  }
  func.func @transform_2(%arg0: i32) -> (i32, i32) {
    %c0_i32 = arith.constant 0 : i32
    %c0_i32_0 = arith.constant 0 : i32
    return %arg0, %c0_i32 : i32, i32
  }
  func.func @transform_3(%arg0: i32) -> (i32, i32) {
    %c0_i32 = arith.constant 0 : i32
    %c0_i32_0 = arith.constant 0 : i32
    return %arg0, %c0_i32 : i32, i32
  }
  func.func @transform_4(%arg0: i32) -> (i32, i32) {
    %c0_i32 = arith.constant 0 : i32
    %c0_i32_0 = arith.constant 0 : i32
    %c0_i32_1 = arith.constant 0 : i32
    return %c0_i32, %c0_i32_0 : i32, i32
  }
  func.func @transform_5(%arg0: i32) -> (i32, i32) {
    %c0_i32 = arith.constant 0 : i32
    %c0_i32_0 = arith.constant 0 : i32
    %c0_i32_1 = arith.constant 0 : i32
    return %c0_i32, %c0_i32_0 : i32, i32
  }
  func.func @transform_6(%arg0: i32) -> (i32, i32) {
    %c0_i32 = arith.constant 0 : i32
    %c0_i32_0 = arith.constant 0 : i32
    %c0_i32_1 = arith.constant 0 : i32
    return %c0_i32, %c0_i32_0 : i32, i32
  }
  func.func @transform_7(%arg0: i32) -> (i32, i32) {
    %c0_i32 = arith.constant 0 : i32
    %c0_i32_0 = arith.constant 0 : i32
    %c0_i32_1 = arith.constant 0 : i32
    return %c0_i32, %c0_i32_0 : i32, i32
  }
  func.func @transform_8(%arg0: i32) -> (i32, i32) {
    %c0_i32 = arith.constant 0 : i32
    %c0_i32_0 = arith.constant 0 : i32
    %c0_i32_1 = arith.constant 0 : i32
    return %c0_i32, %c0_i32_0 : i32, i32
  }
  func.func @transform_9(%arg0: i32) -> (i32, i32) {
    %c0_i32 = arith.constant 0 : i32
    %c0_i32_0 = arith.constant 0 : i32
    %c0_i32_1 = arith.constant 0 : i32
    return %c0_i32, %c0_i32_0 : i32, i32
  }
  func.func @transform_10(%arg0: i32) -> (i32, i32) {
    %c0_i32 = arith.constant 0 : i32
    %c0_i32_0 = arith.constant 0 : i32
    %c0_i32_1 = arith.constant 0 : i32
    return %c0_i32, %c0_i32_0 : i32, i32
  }
  func.func @transform_11(%arg0: i32) -> (i32, i32) {
    %c0_i32 = arith.constant 0 : i32
    %c0_i32_0 = arith.constant 0 : i32
    %c0_i32_1 = arith.constant 0 : i32
    return %c0_i32, %c0_i32_0 : i32, i32
  }
  func.func @transform_12(%arg0: i32) -> (i32, i32) {
    %c0_i32 = arith.constant 0 : i32
    %c0_i32_0 = arith.constant 0 : i32
    return %arg0, %c0_i32 : i32, i32
  }
}

</mosaic_0001>

<llo_original>
// kernel: tpu_custom_call.1
$region0: #{tpu_custom_call.1}
  #allocation0 [shape = 'u32[]', space=smem, size = 0x4, offset = 0x4, fixed_abs, tag = 'smem constant byte address 0x4 - core index']
  #allocation1 [shape = 'u32[144,128]{1,0:T(1,128)}', space=vmem, size = 0x12000, scoped, tag = 'internal scratch']
  %s0 = inlined_call_operand.hbm [shape: f32[8,128], index: 0, kind: input, shape index: {}]
  %s1 = inlined_call_operand.hbm [shape: f32[8,128], index: 1, kind: input, shape index: {}]
  %s2 = inlined_call_operand.hbm [shape: f32[8,128], index: 2, kind: input, shape index: {}]
  %s3 = inlined_call_operand.hbm [shape: f32[8,128], index: 3, kind: input, shape index: {}]
  %s4 = inlined_call_operand.hbm [shape: bf16[128,128], index: 4, kind: input, shape index: {}]
  %s5 = inlined_call_operand.vmem [shape: f32[1,128], index: 5, kind: input, shape index: {}]
  %s6 = inlined_call_operand.hbm [shape: bf16[128,128], index: 6, kind: input, shape index: {}]
  %s7 = inlined_call_operand.vmem [shape: f32[1,128], index: 7, kind: input, shape index: {}]
  %s8 = inlined_call_operand.hbm [shape: bf16[128,128], index: 8, kind: input, shape index: {}]
  %s9 = inlined_call_operand.vmem [shape: f32[1,128], index: 9, kind: input, shape index: {}]
  %s10 = inlined_call_operand.hbm [shape: bf16[128,128], index: 10, kind: input, shape index: {}]
  %s11 = inlined_call_operand.vmem [shape: f32[1,128], index: 11, kind: input, shape index: {}]
  %s12 = inlined_call_operand.hbm [shape: f32[8,128], index: 12, kind: output, shape index: {}]
  %s13 = sld [smem:[#allocation0]]
  $region90: #{tpu_custom_call.1} parent=0
    _
  %s15 = ssub.s32 1, %s13
  %s16 = scalar_select 0, %s15, %s13
  $region1: #{tpu_custom_call.1} parent=0
    #allocation2 [shape = 'u8[4096]{0}', space=vmem, size = 0x1000, scoped, tag = 'input window, operand 0, single buffered']
    #allocation3 [shape = 's32[1]{0}', space=sflag, size = 0x4, scoped, tag = 'scoped memory for tpu_custom_call.1']
    #allocation4 [shape = 's32[1]{0}', space=sflag, size = 0x4, scoped, tag = 'scoped memory for tpu_custom_call.1']
    #allocation5 [shape = 'u8[4096]{0}', space=vmem, size = 0x1000, scoped, tag = 'input window, operand 1, single buffered']
    #allocation6 [shape = 's32[1]{0}', space=sflag, size = 0x4, scoped, tag = 'scoped memory for tpu_custom_call.1']
    #allocation7 [shape = 'u8[4096]{0}', space=vmem, size = 0x1000, scoped, tag = 'input window, operand 2, single buffered']
    #allocation8 [shape = 'u8[4096]{0}', space=vmem, size = 0x1000, scoped, tag = 'input window, operand 3, single buffered']
    #allocation9 [shape = 's32[1]{0}', space=sflag, size = 0x4, scoped, tag = 'scoped memory for tpu_custom_call.1']
    #allocation10 [shape = 'u8[32768]{0}', space=vmem, size = 0x8000, scoped, tag = 'input window, operand 4, single buffered']
    #allocation11 [shape = 'u8[32768]{0}', space=vmem, size = 0x8000, scoped, tag = 'input window, operand 6, single buffered']
    #allocation12 [shape = 's32[1]{0}', space=sflag, size = 0x4, scoped, tag = 'scoped memory for tpu_custom_call.1']
    #allocation13 [shape = 'u8[32768]{0}', space=vmem, size = 0x8000, scoped, tag = 'input window, operand 8, single buffered']
    #allocation14 [shape = 'u8[32768]{0}', space=vmem, size = 0x8000, scoped, tag = 'input window, operand 10, single buffered']
    #allocation15 [shape = 's32[1]{0}', space=sflag, size = 0x4, scoped, tag = 'scoped memory for tpu_custom_call.1']
    #allocation16 [shape = 'u8[4096]{0}', space=vmem, size = 0x1000, scoped, tag = 'output window, operand 0, single buffered']
    %17 = vsyncpa [#allocation3], 0
    %18 = vsyncpa [#allocation6], 0
    %19 = vsyncpa [#allocation9], 0
    %20 = vsyncpa [#allocation12], 0
    %21 = vsyncpa [#allocation15], 0
    %22 = vsyncpa [#allocation4], 0
    // Predicated region
    $region2: #{tpu_custom_call.1} parent=1 // pred_check
      _
    $region3: #{tpu_custom_call.1} parent=1 // pred_check_branch
      %24 = sbr.rel (0) target = $region5
    $region4: #{tpu_custom_call.1} parent=1 // pred_region
      %s26 = ssub.s32 128, 128
      %27 = vsyncadd [#allocation3], %s26
      %s29 = sshll.u32 [#allocation2], 4
      %s30 = int_to_ptr.vmem [resolvable:$true] %s29
      %32 = dma.hbm_to_vmem [thread:$0]  %s0, 128, %s30, [#allocation3]
    $region5: #{tpu_custom_call.1} parent=1 // pred_fallthru
      _
    // Predicated region
    $region6: #{tpu_custom_call.1} parent=1 // pred_check
      _
    $region7: #{tpu_custom_call.1} parent=1 // pred_check_branch
      %34 = sbr.rel (0) target = $region9
    $region8: #{tpu_custom_call.1} parent=1 // pred_region
      %s36 = ssub.s32 128, 128
      %37 = vsyncadd [#allocation6], %s36
      %s39 = sshll.u32 [#allocation5], 4
      %s40 = int_to_ptr.vmem [resolvable:$true] %s39
      %42 = dma.hbm_to_vmem [thread:$0]  %s1, 128, %s40, [#allocation6]
    $region9: #{tpu_custom_call.1} parent=1 // pred_fallthru
      _
    // Predicated region
    $region10: #{tpu_custom_call.1} parent=1 // pred_check
      _
    $region11: #{tpu_custom_call.1} parent=1 // pred_check_branch
      %44 = sbr.rel (0) target = $region13
    $region12: #{tpu_custom_call.1} parent=1 // pred_region
      %s46 = ssub.s32 128, 128
      %47 = vsyncadd [#allocation6], %s46
      %s49 = sshll.u32 [#allocation7], 4
      %s50 = int_to_ptr.vmem [resolvable:$true] %s49
      %52 = dma.hbm_to_vmem [thread:$0]  %s2, 128, %s50, [#allocation6]
    $region13: #{tpu_custom_call.1} parent=1 // pred_fallthru
      _
    // Predicated region
    $region14: #{tpu_custom_call.1} parent=1 // pred_check
      _
    $region15: #{tpu_custom_call.1} parent=1 // pred_check_branch
      %54 = sbr.rel (0) target = $region17
    $region16: #{tpu_custom_call.1} parent=1 // pred_region
      %s56 = ssub.s32 128, 128
      %57 = vsyncadd [#allocation9], %s56
      %s59 = sshll.u32 [#allocation8], 4
      %s60 = int_to_ptr.vmem [resolvable:$true] %s59
      %62 = dma.hbm_to_vmem [thread:$0]  %s3, 128, %s60, [#allocation9]
    $region17: #{tpu_custom_call.1} parent=1 // pred_fallthru
      _
    // Predicated region
    $region18: #{tpu_custom_call.1} parent=1 // pred_check
      _
    $region19: #{tpu_custom_call.1} parent=1 // pred_check_branch
      %64 = sbr.rel (0) target = $region21
    $region20: #{tpu_custom_call.1} parent=1 // pred_region
      %s66 = ssub.s32 1024, 1024
      %67 = vsyncadd [#allocation9], %s66
      %s68 = sshll.u32 [#allocation10], 4
      %s69 = int_to_ptr.vmem [resolvable:$true] %s68
      %74 = dma.hbm_to_vmem [thread:$0]  %s4, 1024, %s69, [#allocation9], 64, 64, 4
    $region21: #{tpu_custom_call.1} parent=1 // pred_fallthru
      _
    // Predicated region
    $region22: #{tpu_custom_call.1} parent=1 // pred_check
      _
    $region23: #{tpu_custom_call.1} parent=1 // pred_check_branch
      %76 = sbr.rel (0) target = $region25
    $region24: #{tpu_custom_call.1} parent=1 // pred_region
      _
    $region25: #{tpu_custom_call.1} parent=1 // pred_fallthru
      _
    // Predicated region
    $region26: #{tpu_custom_call.1} parent=1 // pred_check
      _
    $region27: #{tpu_custom_call.1} parent=1 // pred_check_branch
      %78 = sbr.rel (0) target = $region29
    $region28: #{tpu_custom_call.1} parent=1 // pred_region
      %s80 = ssub.s32 1024, 1024
      %81 = vsyncadd [#allocation12], %s80
      %s82 = sshll.u32 [#allocation11], 4
      %s83 = int_to_ptr.vmem [resolvable:$true] %s82
      %88 = dma.hbm_to_vmem [thread:$0]  %s6, 1024, %s83, [#allocation12], 64, 64, 4
    $region29: #{tpu_custom_call.1} parent=1 // pred_fallthru
      _
    // Predicated region
    $region30: #{tpu_custom_call.1} parent=1 // pred_check
      _
    $region31: #{tpu_custom_call.1} parent=1 // pred_check_branch
      %90 = sbr.rel (0) target = $region33
    $region32: #{tpu_custom_call.1} parent=1 // pred_region
      _
    $region33: #{tpu_custom_call.1} parent=1 // pred_fallthru
      _
    // Predicated region
    $region34: #{tpu_custom_call.1} parent=1 // pred_check
      _
    $region35: #{tpu_custom_call.1} parent=1 // pred_check_branch
      %92 = sbr.rel (0) target = $region37
    $region36: #{tpu_custom_call.1} parent=1 // pred_region
      %s94 = ssub.s32 1024, 1024
      %95 = vsyncadd [#allocation12], %s94
      %s96 = sshll.u32 [#allocation13], 4
      %s97 = int_to_ptr.vmem [resolvable:$true] %s96
      %102 = dma.hbm_to_vmem [thread:$0]  %s8, 1024, %s97, [#allocation12], 64, 64, 4
    $region37: #{tpu_custom_call.1} parent=1 // pred_fallthru
      _
    // Predicated region
    $region38: #{tpu_custom_call.1} parent=1 // pred_check
      _
    $region39: #{tpu_custom_call.1} parent=1 // pred_check_branch
      %104 = sbr.rel (0) target = $region41
    $region40: #{tpu_custom_call.1} parent=1 // pred_region
      _
    $region41: #{tpu_custom_call.1} parent=1 // pred_fallthru
      _
    // Predicated region
    $region42: #{tpu_custom_call.1} parent=1 // pred_check
      _
    $region43: #{tpu_custom_call.1} parent=1 // pred_check_branch
      %106 = sbr.rel (0) target = $region45
    $region44: #{tpu_custom_call.1} parent=1 // pred_region
      %s108 = ssub.s32 1024, 1024
      %109 = vsyncadd [#allocation15], %s108
      %s110 = sshll.u32 [#allocation14], 4
      %s111 = int_to_ptr.vmem [resolvable:$true] %s110
      %116 = dma.hbm_to_vmem [thread:$0]  %s10, 1024, %s111, [#allocation15], 64, 64, 4
    $region45: #{tpu_custom_call.1} parent=1 // pred_fallthru
      _
    // Predicated region
    $region46: #{tpu_custom_call.1} parent=1 // pred_check
      _
    $region47: #{tpu_custom_call.1} parent=1 // pred_check_branch
      %118 = sbr.rel (0) target = $region49
    $region48: #{tpu_custom_call.1} parent=1 // pred_region
      _
    $region49: #{tpu_custom_call.1} parent=1 // pred_fallthru
      _
    // Predicated region
    $region50: #{tpu_custom_call.1} parent=1 // pred_check
      _
    $region51: #{tpu_custom_call.1} parent=1 // pred_check_branch
      %120 = sbr.rel (0) target = $region53
    $region52: #{tpu_custom_call.1} parent=1 // pred_region
      %121 = dma.done [#allocation3], 128
    $region53: #{tpu_custom_call.1} parent=1 // pred_fallthru
      _
    // Predicated region
    $region54: #{tpu_custom_call.1} parent=1 // pred_check
      _
    $region55: #{tpu_custom_call.1} parent=1 // pred_check_branch
      %123 = sbr.rel (0) target = $region57
    $region56: #{tpu_custom_call.1} parent=1 // pred_region
      %124 = dma.done [#allocation6], 128
    $region57: #{tpu_custom_call.1} parent=1 // pred_fallthru
      _
    // Predicated region
    $region58: #{tpu_custom_call.1} parent=1 // pred_check
      _
    $region59: #{tpu_custom_call.1} parent=1 // pred_check_branch
      %126 = sbr.rel (0) target = $region61
    $region60: #{tpu_custom_call.1} parent=1 // pred_region
      %127 = dma.done [#allocation6], 128
    $region61: #{tpu_custom_call.1} parent=1 // pred_fallthru
      _
    // Predicated region
    $region62: #{tpu_custom_call.1} parent=1 // pred_check
      _
    $region63: #{tpu_custom_call.1} parent=1 // pred_check_branch
      %129 = sbr.rel (0) target = $region65
    $region64: #{tpu_custom_call.1} parent=1 // pred_region
      %130 = dma.done [#allocation9], 128
    $region65: #{tpu_custom_call.1} parent=1 // pred_fallthru
      _
    // Predicated region
    $region66: #{tpu_custom_call.1} parent=1 // pred_check
      _
    $region67: #{tpu_custom_call.1} parent=1 // pred_check_branch
      %132 = sbr.rel (0) target = $region69
    $region68: #{tpu_custom_call.1} parent=1 // pred_region
      %133 = dma.done [#allocation9], 1024
    $region69: #{tpu_custom_call.1} parent=1 // pred_fallthru
      _
    // Predicated region
    $region70: #{tpu_custom_call.1} parent=1 // pred_check
      _
    $region71: #{tpu_custom_call.1} parent=1 // pred_check_branch
      %135 = sbr.rel (0) target = $region73
    $region72: #{tpu_custom_call.1} parent=1 // pred_region
      %136 = dma.done [#allocation12], 1024
    $region73: #{tpu_custom_call.1} parent=1 // pred_fallthru
      _
    // Predicated region
    $region74: #{tpu_custom_call.1} parent=1 // pred_check
      _
    $region75: #{tpu_custom_call.1} parent=1 // pred_check_branch
      %138 = sbr.rel (0) target = $region77
    $region76: #{tpu_custom_call.1} parent=1 // pred_region
      %139 = dma.done [#allocation12], 1024
    $region77: #{tpu_custom_call.1} parent=1 // pred_fallthru
      _
    // Predicated region
    $region78: #{tpu_custom_call.1} parent=1 // pred_check
      _
    $region79: #{tpu_custom_call.1} parent=1 // pred_check_branch
      %141 = sbr.rel (0) target = $region81
    $region80: #{tpu_custom_call.1} parent=1 // pred_region
      %142 = dma.done [#allocation15], 1024
    $region81: #{tpu_custom_call.1} parent=1 // pred_fallthru
      _
    %v144 = vld [vmem:[#allocation2] sm:$0xff]
    %v145 = vpack.c.bf16 %v144, %v144
    %v146 = vld [vmem:[#allocation10] sm:$0xf]
    %v147 = vld [vmem:[#allocation10 + $0x4] sm:$0xf]
    %v148 = vld [vmem:[#allocation10 + $0x8] sm:$0xf]
    %v149 = vld [vmem:[#allocation10 + $0xc] sm:$0xf]
    %v150 = vld [vmem:[#allocation10 + $0x10] sm:$0xf]
    %v151 = vld [vmem:[#allocation10 + $0x14] sm:$0xf]
    %v152 = vld [vmem:[#allocation10 + $0x18] sm:$0xf]
    %v153 = vld [vmem:[#allocation10 + $0x1c] sm:$0xf]
    %v154 = vld [vmem:[#allocation10 + $0x20] sm:$0xf]
    %v155 = vld [vmem:[#allocation10 + $0x24] sm:$0xf]
    %v156 = vld [vmem:[#allocation10 + $0x28] sm:$0xf]
    %v157 = vld [vmem:[#allocation10 + $0x2c] sm:$0xf]
    %v158 = vld [vmem:[#allocation10 + $0x30] sm:$0xf]
    %v159 = vld [vmem:[#allocation10 + $0x34] sm:$0xf]
    %v160 = vld [vmem:[#allocation10 + $0x38] sm:$0xf]
    %v161 = vld [vmem:[#allocation10 + $0x3c] sm:$0xf]
    %v162 = vld [vmem:[%s5] sm:$0x1]
    %v164 = vlaneseq
    %v165 = vshrl.u32 %v164, 7
    %v166 = vsub.s32 0, %v165
    %v167 = vrot.slane %v162, %v166
    %v185 = vunpack.c.l.b16 %v146
    %v186 = vunpack.c.l.b16 %v147
    %v187 = vunpack.c.l.b16 %v148
    %v188 = vunpack.c.l.b16 %v149
    %v189 = vunpack.c.l.b16 %v150
    %v190 = vunpack.c.l.b16 %v151
    %v191 = vunpack.c.l.b16 %v152
    %v192 = vunpack.c.l.b16 %v153
    %v193 = vunpack.c.l.b16 %v154
    %v194 = vunpack.c.l.b16 %v155
    %v195 = vunpack.c.l.b16 %v156
    %v196 = vunpack.c.l.b16 %v157
    %v197 = vunpack.c.l.b16 %v158
    %v198 = vunpack.c.l.b16 %v159
    %v199 = vunpack.c.l.b16 %v160
    %v200 = vunpack.c.l.b16 %v161
    %v201 = vpack.c.b16 %v186, %v185
    %v202 = vpack.c.b16 %v188, %v187
    %v203 = vpack.c.b16 %v190, %v189
    %v204 = vpack.c.b16 %v192, %v191
    %v205 = vpack.c.b16 %v194, %v193
    %v206 = vpack.c.b16 %v196, %v195
    %v207 = vpack.c.b16 %v198, %v197
    %v208 = vpack.c.b16 %v200, %v199
    %217 = vmatprep.subr.bf16.mxu0 0
    %218 = vmatpush1.bf16.msra.mxu0 %v208
    %219 = vmatprep.subr.bf16.mxu0 0
    %220 = vmatpush1.bf16.msra.mxu0 %v207
    %221 = vmatprep.subr.bf16.mxu0 0
    %222 = vmatpush1.bf16.msra.mxu0 %v206
    %223 = vmatprep.subr.bf16.mxu0 0
    %224 = vmatpush1.bf16.msra.mxu0 %v205
    %225 = vmatprep.subr.bf16.mxu0 0
    %226 = vmatpush1.bf16.msra.mxu0 %v204
    %227 = vmatprep.subr.bf16.mxu0 0
    %228 = vmatpush1.bf16.msra.mxu0 %v203
    %229 = vmatprep.subr.bf16.mxu0 0
    %230 = vmatpush1.bf16.msra.mxu0 %v202
    %231 = vmatprep.subr.bf16.mxu0 0
    %232 = vmatpush1.bf16.msra.mxu0 %v201
    %233 = vmatprep.subr.bf16.mxu0 0
    %234 = vmatpush2.bf16.msra.mxu0 0
    %235 = vmatprep.subr.bf16.mxu0 0
    %236 = vmatpush2.bf16.msra.mxu0 0
    %237 = vmatprep.subr.bf16.mxu0 0
    %238 = vmatpush2.bf16.msra.mxu0 0
    %239 = vmatprep.subr.bf16.mxu0 0
    %240 = vmatpush2.bf16.msra.mxu0 0
    %241 = vmatprep.subr.bf16.mxu0 0
    %242 = vmatpush2.bf16.msra.mxu0 0
    %243 = vmatprep.subr.bf16.mxu0 0
    %244 = vmatpush2.bf16.msra.mxu0 0
    %245 = vmatprep.subr.bf16.mxu0 0
    %246 = vmatpush2.bf16.msra.mxu0 0
    %247 = vmatprep.subr.bf16.mxu0 0
    %248 = vmatpush2.bf16.msra.mxu0 0
    %249 = vmatprep.mubr.bf16.mxu0 0
    %250 = vmatmul.mubr.bf16.gmra.mxu0 %v145
    %v251 = vpop.f32.mrf.mxu0
    %v252 = vadd.f32 %v167, %v251
    %v253 = vpop.f32.mrf.mxu0
    %v254 = vpop.f32.mrf.mxu0
    %v255 = vpop.f32.mrf.mxu0
    %256 = vdwg.mxu0
    %v257 = vmax.f32 %v252, 0.0
    %v258 = vld [vmem:[#allocation5] sm:$0xff]
    %v259 = vmul.f32 %v257, %v258
    %v260 = vpack.c.bf16 %v259, %v259
    %v261 = vld [vmem:[#allocation11] sm:$0xf]
    %v262 = vld [vmem:[#allocation11 + $0x4] sm:$0xf]
    %v263 = vld [vmem:[#allocation11 + $0x8] sm:$0xf]
    %v264 = vld [vmem:[#allocation11 + $0xc] sm:$0xf]
    %v265 = vld [vmem:[#allocation11 + $0x10] sm:$0xf]
    %v266 = vld [vmem:[#allocation11 + $0x14] sm:$0xf]
    %v267 = vld [vmem:[#allocation11 + $0x18] sm:$0xf]
    %v268 = vld [vmem:[#allocation11 + $0x1c] sm:$0xf]
    %v269 = vld [vmem:[#allocation11 + $0x20] sm:$0xf]
    %v270 = vld [vmem:[#allocation11 + $0x24] sm:$0xf]
    %v271 = vld [vmem:[#allocation11 + $0x28] sm:$0xf]
    %v272 = vld [vmem:[#allocation11 + $0x2c] sm:$0xf]
    %v273 = vld [vmem:[#allocation11 + $0x30] sm:$0xf]
    %v274 = vld [vmem:[#allocation11 + $0x34] sm:$0xf]
    %v275 = vld [vmem:[#allocation11 + $0x38] sm:$0xf]
    %v276 = vld [vmem:[#allocation11 + $0x3c] sm:$0xf]
    %v277 = vld [vmem:[%s7] sm:$0x1]
    %v279 = vlaneseq
    %v280 = vshrl.u32 %v279, 7
    %v281 = vsub.s32 0, %v280
    %v282 = vrot.slane %v277, %v281
    %v300 = vunpack.c.l.b16 %v261
    %v301 = vunpack.c.l.b16 %v262
    %v302 = vunpack.c.l.b16 %v263
    %v303 = vunpack.c.l.b16 %v264
    %v304 = vunpack.c.l.b16 %v265
    %v305 = vunpack.c.l.b16 %v266
    %v306 = vunpack.c.l.b16 %v267
    %v307 = vunpack.c.l.b16 %v268
    %v308 = vunpack.c.l.b16 %v269
    %v309 = vunpack.c.l.b16 %v270
    %v310 = vunpack.c.l.b16 %v271
    %v311 = vunpack.c.l.b16 %v272
    %v312 = vunpack.c.l.b16 %v273
    %v313 = vunpack.c.l.b16 %v274
    %v314 = vunpack.c.l.b16 %v275
    %v315 = vunpack.c.l.b16 %v276
    %v316 = vpack.c.b16 %v301, %v300
    %v317 = vpack.c.b16 %v303, %v302
    %v318 = vpack.c.b16 %v305, %v304
    %v319 = vpack.c.b16 %v307, %v306
    %v320 = vpack.c.b16 %v309, %v308
    %v321 = vpack.c.b16 %v311, %v310
    %v322 = vpack.c.b16 %v313, %v312
    %v323 = vpack.c.b16 %v315, %v314
    %332 = vmatprep.subr.bf16.mxu0 0
    %333 = vmatpush1.bf16.msra.mxu0 %v323
    %334 = vmatprep.subr.bf16.mxu0 0
    %335 = vmatpush1.bf16.msra.mxu0 %v322
    %336 = vmatprep.subr.bf16.mxu0 0
    %337 = vmatpush1.bf16.msra.mxu0 %v321
    %338 = vmatprep.subr.bf16.mxu0 0
    %339 = vmatpush1.bf16.msra.mxu0 %v320
    %340 = vmatprep.subr.bf16.mxu0 0
    %341 = vmatpush1.bf16.msra.mxu0 %v319
    %342 = vmatprep.subr.bf16.mxu0 0
    %343 = vmatpush1.bf16.msra.mxu0 %v318
    %344 = vmatprep.subr.bf16.mxu0 0
    %345 = vmatpush1.bf16.msra.mxu0 %v317
    %346 = vmatprep.subr.bf16.mxu0 0
    %347 = vmatpush1.bf16.msra.mxu0 %v316
    %348 = vmatprep.subr.bf16.mxu0 0
    %349 = vmatpush2.bf16.msra.mxu0 0
    %350 = vmatprep.subr.bf16.mxu0 0
    %351 = vmatpush2.bf16.msra.mxu0 0
    %352 = vmatprep.subr.bf16.mxu0 0
    %353 = vmatpush2.bf16.msra.mxu0 0
    %354 = vmatprep.subr.bf16.mxu0 0
    %355 = vmatpush2.bf16.msra.mxu0 0
    %356 = vmatprep.subr.bf16.mxu0 0
    %357 = vmatpush2.bf16.msra.mxu0 0
    %358 = vmatprep.subr.bf16.mxu0 0
    %359 = vmatpush2.bf16.msra.mxu0 0
    %360 = vmatprep.subr.bf16.mxu0 0
    %361 = vmatpush2.bf16.msra.mxu0 0
    %362 = vmatprep.subr.bf16.mxu0 0
    %363 = vmatpush2.bf16.msra.mxu0 0
    %364 = vmatprep.mubr.bf16.mxu0 0
    %365 = vmatmul.mubr.bf16.gmra.mxu0 %v260
    %v366 = vpop.f32.mrf.mxu0
    %v367 = vadd.f32 %v282, %v366
    %v368 = vpop.f32.mrf.mxu0
    %v369 = vpop.f32.mrf.mxu0
    %v370 = vpop.f32.mrf.mxu0
    %371 = vdwg.mxu0
    %v372 = vmax.f32 %v367, 0.0
    %v373 = vld [vmem:[#allocation7] sm:$0xff]
    %v374 = vmul.f32 %v372, %v373
    %v375 = vpack.c.bf16 %v374, %v374
    %v376 = vld [vmem:[#allocation13] sm:$0xf]
    %v377 = vld [vmem:[#allocation13 + $0x4] sm:$0xf]
    %v378 = vld [vmem:[#allocation13 + $0x8] sm:$0xf]
    %v379 = vld [vmem:[#allocation13 + $0xc] sm:$0xf]
    %v380 = vld [vmem:[#allocation13 + $0x10] sm:$0xf]
    %v381 = vld [vmem:[#allocation13 + $0x14] sm:$0xf]
    %v382 = vld [vmem:[#allocation13 + $0x18] sm:$0xf]
    %v383 = vld [vmem:[#allocation13 + $0x1c] sm:$0xf]
    %v384 = vld [vmem:[#allocation13 + $0x20] sm:$0xf]
    %v385 = vld [vmem:[#allocation13 + $0x24] sm:$0xf]
    %v386 = vld [vmem:[#allocation13 + $0x28] sm:$0xf]
    %v387 = vld [vmem:[#allocation13 + $0x2c] sm:$0xf]
    %v388 = vld [vmem:[#allocation13 + $0x30] sm:$0xf]
    %v389 = vld [vmem:[#allocation13 + $0x34] sm:$0xf]
    %v390 = vld [vmem:[#allocation13 + $0x38] sm:$0xf]
    %v391 = vld [vmem:[#allocation13 + $0x3c] sm:$0xf]
    %v392 = vld [vmem:[%s9] sm:$0x1]
    %v394 = vlaneseq
    %v395 = vshrl.u32 %v394, 7
    %v396 = vsub.s32 0, %v395
    %v397 = vrot.slane %v392, %v396
    %v415 = vunpack.c.l.b16 %v376
    %v416 = vunpack.c.l.b16 %v377
    %v417 = vunpack.c.l.b16 %v378
    %v418 = vunpack.c.l.b16 %v379
    %v419 = vunpack.c.l.b16 %v380
    %v420 = vunpack.c.l.b16 %v381
    %v421 = vunpack.c.l.b16 %v382
    %v422 = vunpack.c.l.b16 %v383
    %v423 = vunpack.c.l.b16 %v384
    %v424 = vunpack.c.l.b16 %v385
    %v425 = vunpack.c.l.b16 %v386
    %v426 = vunpack.c.l.b16 %v387
    %v427 = vunpack.c.l.b16 %v388
    %v428 = vunpack.c.l.b16 %v389
    %v429 = vunpack.c.l.b16 %v390
    %v430 = vunpack.c.l.b16 %v391
    %v431 = vpack.c.b16 %v416, %v415
    %v432 = vpack.c.b16 %v418, %v417
    %v433 = vpack.c.b16 %v420, %v419
    %v434 = vpack.c.b16 %v422, %v421
    %v435 = vpack.c.b16 %v424, %v423
    %v436 = vpack.c.b16 %v426, %v425
    %v437 = vpack.c.b16 %v428, %v427
    %v438 = vpack.c.b16 %v430, %v429
    %447 = vmatprep.subr.bf16.mxu0 0
    %448 = vmatpush1.bf16.msra.mxu0 %v438
    %449 = vmatprep.subr.bf16.mxu0 0
    %450 = vmatpush1.bf16.msra.mxu0 %v437
    %451 = vmatprep.subr.bf16.mxu0 0
    %452 = vmatpush1.bf16.msra.mxu0 %v436
    %453 = vmatprep.subr.bf16.mxu0 0
    %454 = vmatpush1.bf16.msra.mxu0 %v435
    %455 = vmatprep.subr.bf16.mxu0 0
    %456 = vmatpush1.bf16.msra.mxu0 %v434
    %457 = vmatprep.subr.bf16.mxu0 0
    %458 = vmatpush1.bf16.msra.mxu0 %v433
    %459 = vmatprep.subr.bf16.mxu0 0
    %460 = vmatpush1.bf16.msra.mxu0 %v432
    %461 = vmatprep.subr.bf16.mxu0 0
    %462 = vmatpush1.bf16.msra.mxu0 %v431
    %463 = vmatprep.subr.bf16.mxu0 0
    %464 = vmatpush2.bf16.msra.mxu0 0
    %465 = vmatprep.subr.bf16.mxu0 0
    %466 = vmatpush2.bf16.msra.mxu0 0
    %467 = vmatprep.subr.bf16.mxu0 0
    %468 = vmatpush2.bf16.msra.mxu0 0
    %469 = vmatprep.subr.bf16.mxu0 0
    %470 = vmatpush2.bf16.msra.mxu0 0
    %471 = vmatprep.subr.bf16.mxu0 0
    %472 = vmatpush2.bf16.msra.mxu0 0
    %473 = vmatprep.subr.bf16.mxu0 0
    %474 = vmatpush2.bf16.msra.mxu0 0
    %475 = vmatprep.subr.bf16.mxu0 0
    %476 = vmatpush2.bf16.msra.mxu0 0
    %477 = vmatprep.subr.bf16.mxu0 0
    %478 = vmatpush2.bf16.msra.mxu0 0
    %479 = vmatprep.mubr.bf16.mxu0 0
    %480 = vmatmul.mubr.bf16.gmra.mxu0 %v375
    %v481 = vpop.f32.mrf.mxu0
    %v482 = vadd.f32 %v397, %v481
    %v483 = vpop.f32.mrf.mxu0
    %v484 = vpop.f32.mrf.mxu0
    %v485 = vpop.f32.mrf.mxu0
    %486 = vdwg.mxu0
    %v487 = vmax.f32 %v482, 0.0
    %v488 = vld [vmem:[#allocation8] sm:$0xff]
    %v489 = vmul.f32 %v487, %v488
    %v490 = vpack.c.bf16 %v489, %v489
    %v491 = vld [vmem:[#allocation14] sm:$0xf]
    %v492 = vld [vmem:[#allocation14 + $0x4] sm:$0xf]
    %v493 = vld [vmem:[#allocation14 + $0x8] sm:$0xf]
    %v494 = vld [vmem:[#allocation14 + $0xc] sm:$0xf]
    %v495 = vld [vmem:[#allocation14 + $0x10] sm:$0xf]
    %v496 = vld [vmem:[#allocation14 + $0x14] sm:$0xf]
    %v497 = vld [vmem:[#allocation14 + $0x18] sm:$0xf]
    %v498 = vld [vmem:[#allocation14 + $0x1c] sm:$0xf]
    %v499 = vld [vmem:[#allocation14 + $0x20] sm:$0xf]
    %v500 = vld [vmem:[#allocation14 + $0x24] sm:$0xf]
    %v501 = vld [vmem:[#allocation14 + $0x28] sm:$0xf]
    %v502 = vld [vmem:[#allocation14 + $0x2c] sm:$0xf]
    %v503 = vld [vmem:[#allocation14 + $0x30] sm:$0xf]
    %v504 = vld [vmem:[#allocation14 + $0x34] sm:$0xf]
    %v505 = vld [vmem:[#allocation14 + $0x38] sm:$0xf]
    %v506 = vld [vmem:[#allocation14 + $0x3c] sm:$0xf]
    %v507 = vld [vmem:[%s11] sm:$0x1]
    %v509 = vlaneseq
    %v510 = vshrl.u32 %v509, 7
    %v511 = vsub.s32 0, %v510
    %v512 = vrot.slane %v507, %v511
    %v530 = vunpack.c.l.b16 %v491
    %v531 = vunpack.c.l.b16 %v492
    %v532 = vunpack.c.l.b16 %v493
    %v533 = vunpack.c.l.b16 %v494
    %v534 = vunpack.c.l.b16 %v495
    %v535 = vunpack.c.l.b16 %v496
    %v536 = vunpack.c.l.b16 %v497
    %v537 = vunpack.c.l.b16 %v498
    %v538 = vunpack.c.l.b16 %v499
    %v539 = vunpack.c.l.b16 %v500
    %v540 = vunpack.c.l.b16 %v501
    %v541 = vunpack.c.l.b16 %v502
    %v542 = vunpack.c.l.b16 %v503
    %v543 = vunpack.c.l.b16 %v504
    %v544 = vunpack.c.l.b16 %v505
    %v545 = vunpack.c.l.b16 %v506
    %v546 = vpack.c.b16 %v531, %v530
    %v547 = vpack.c.b16 %v533, %v532
    %v548 = vpack.c.b16 %v535, %v534
    %v549 = vpack.c.b16 %v537, %v536
    %v550 = vpack.c.b16 %v539, %v538
    %v551 = vpack.c.b16 %v541, %v540
    %v552 = vpack.c.b16 %v543, %v542
    %v553 = vpack.c.b16 %v545, %v544
    %562 = vmatprep.subr.bf16.mxu0 0
    %563 = vmatpush1.bf16.msra.mxu0 %v553
    %564 = vmatprep.subr.bf16.mxu0 0
    %565 = vmatpush1.bf16.msra.mxu0 %v552
    %566 = vmatprep.subr.bf16.mxu0 0
    %567 = vmatpush1.bf16.msra.mxu0 %v551
    %568 = vmatprep.subr.bf16.mxu0 0
    %569 = vmatpush1.bf16.msra.mxu0 %v550
    %570 = vmatprep.subr.bf16.mxu0 0
    %571 = vmatpush1.bf16.msra.mxu0 %v549
    %572 = vmatprep.subr.bf16.mxu0 0
    %573 = vmatpush1.bf16.msra.mxu0 %v548
    %574 = vmatprep.subr.bf16.mxu0 0
    %575 = vmatpush1.bf16.msra.mxu0 %v547
    %576 = vmatprep.subr.bf16.mxu0 0
    %577 = vmatpush1.bf16.msra.mxu0 %v546
    %578 = vmatprep.subr.bf16.mxu0 0
    %579 = vmatpush2.bf16.msra.mxu0 0
    %580 = vmatprep.subr.bf16.mxu0 0
    %581 = vmatpush2.bf16.msra.mxu0 0
    %582 = vmatprep.subr.bf16.mxu0 0
    %583 = vmatpush2.bf16.msra.mxu0 0
    %584 = vmatprep.subr.bf16.mxu0 0
    %585 = vmatpush2.bf16.msra.mxu0 0
    %586 = vmatprep.subr.bf16.mxu0 0
    %587 = vmatpush2.bf16.msra.mxu0 0
    %588 = vmatprep.subr.bf16.mxu0 0
    %589 = vmatpush2.bf16.msra.mxu0 0
    %590 = vmatprep.subr.bf16.mxu0 0
    %591 = vmatpush2.bf16.msra.mxu0 0
    %592 = vmatprep.subr.bf16.mxu0 0
    %593 = vmatpush2.bf16.msra.mxu0 0
    %594 = vmatprep.mubr.bf16.mxu0 0
    %595 = vmatmul.mubr.bf16.gmra.mxu0 %v490
    %v596 = vpop.f32.mrf.mxu0
    %v597 = vadd.f32 %v512, %v596
    %v598 = vpop.f32.mrf.mxu0
    %v599 = vpop.f32.mrf.mxu0
    %v600 = vpop.f32.mrf.mxu0
    %601 = vdwg.mxu0
    %v602 = vlaneseq
    %v603 = vand.u32 %v602, 127
    %vm604 = vcmp.lt.s32.totalorder %v603, 10
    %v605 = vsel %vm604, %v597, -1e+30
    %606 = vmax.xlane.f32.xlu0 %v605
    %v607 = vpop.xlane.xlu0 %606
    %v608 = vsub.f32 %v605, %v607
    %v609 = vmul.f32 %v608, 1.442695
    %v610 = vpow.pop %v609
    %611 = vadd.xlane.f32.xlu0 %v610
    %v612 = vpop.xlane.xlu0 %611
    %v613 = vlog2.pop %v612
    %v614 = vmul.f32 %v613, 0.6931472
    %v615 = vadd.f32 %v607, %v614
    %v616 = vsub.f32 %v605, %v615
    %617 = vst [vmem:[#allocation16] sm:$0xff] %v616
    // Predicated region
    $region82: #{tpu_custom_call.1} parent=1 // pred_check
      _
    $region83: #{tpu_custom_call.1} parent=1 // pred_check_branch
      %619 = sbr.rel (0) target = $region85
    $region84: #{tpu_custom_call.1} parent=1 // pred_region
      %s621 = ssub.s32 128, 128
      %622 = vsyncadd [#allocation4], %s621
      %s624 = sshll.u32 [#allocation16], 4
      %s625 = int_to_ptr.vmem [resolvable:$true] %s624
      %627 = dma.vmem_to_hbm [thread:$0]  %s625, 128, %s12, [#allocation4]
    $region85: #{tpu_custom_call.1} parent=1 // pred_fallthru
      _
    // Predicated region
    $region86: #{tpu_custom_call.1} parent=1 // pred_check
      _
    $region87: #{tpu_custom_call.1} parent=1 // pred_check_branch
      %629 = sbr.rel (0) target = $region89
    $region88: #{tpu_custom_call.1} parent=1 // pred_region
      %630 = dma.done [#allocation4], 128
    $region89: #{tpu_custom_call.1} parent=1 // pred_fallthru
      _
    %631 = vsyncpa [#allocation3], 1
    %632 = vsyncpa [#allocation6], 1
    %633 = vsyncpa [#allocation9], 1
    %634 = vsyncpa [#allocation12], 1
    %635 = vsyncpa [#allocation15], 1
    %636 = vsyncpa [#allocation4], 1

</llo_original>
